<compile_context>
chip_gen: v7x
topology: tpu7x:2x2x1
jax: 0.10.0
libtpu: 0.0.40
codegen_flags: <defaults>
</compile_context>

<pallas_src>
import jax
import jax.numpy as jnp
from jax.experimental import pallas as pl
from jax.experimental.pallas import tpu as pltpu

INPUT_SIZE = 20
HIDDEN_SIZE = 64
OUTPUT_SIZE = 16
BATCH = 200          # demo batch; wrapper handles any B by padding to TILE_B

LANE = 128           # pad feature / hidden / output dims to one full lane width
TILE_B = 128         # batch rows per grid step (fills 8x128 vregs & MXU rows)


def mlp_kernel(x_ref, w1_ref, w2_ref, o_ref):
    # fc1 + bias: bias lives in row LANE-1 of w1_pack, x carries a constant 1.0 lane.
    h = jnp.dot(x_ref[...], w1_ref[...], preferred_element_type=jnp.float32)
    # ReLU (the constant lane is 1.0 -> stays 1.0 through the ReLU).
    h = jnp.maximum(h, 0.0)
    # fc2 + bias: bias lives in row LANE-1 of w2_pack.
    out = jnp.dot(h, w2_ref[...], preferred_element_type=jnp.float32)
    o_ref[...] = out.astype(o_ref.dtype)


def pack_params(w1, b1, w2, b2):
    """Pack (weight, bias) pairs into lane-dense (128, 128) slabs. Done ONCE.

    Affine-via-padding layout:
      x_pad[:, :F] = x,  x_pad[:, 127] = 1
      w1_pack[:F, :H] = w1, w1_pack[127, :H] = b1, w1_pack[127, 127] = 1
        -> h = relu(x_pad @ w1_pack):  h[:, :H] = relu(x@w1 + b1),  h[:, 127] = 1
      w2_pack[:H, :O] = w2, w2_pack[127, :O] = b2
        -> (h @ w2_pack)[:, :O] = relu(x@w1 + b1) @ w2 + b2
    """
    w1_pack = jnp.zeros((LANE, LANE), jnp.float32)
    w1_pack = w1_pack.at[:INPUT_SIZE, :HIDDEN_SIZE].set(w1.astype(jnp.float32))
    w1_pack = w1_pack.at[LANE - 1, :HIDDEN_SIZE].set(b1.reshape(-1).astype(jnp.float32))
    w1_pack = w1_pack.at[LANE - 1, LANE - 1].set(1.0)

    w2_pack = jnp.zeros((LANE, LANE), jnp.float32)
    w2_pack = w2_pack.at[:HIDDEN_SIZE, :OUTPUT_SIZE].set(w2.astype(jnp.float32))
    w2_pack = w2_pack.at[LANE - 1, :OUTPUT_SIZE].set(b2.reshape(-1).astype(jnp.float32))
    return w1_pack, w2_pack


@jax.jit
def skin_condition_forward(x, w1_pack, w2_pack):
    B = x.shape[0]
    n_tiles = pl.cdiv(B, TILE_B)
    Bp = n_tiles * TILE_B

    # Lane-dense, (8,128)-aligned input slab; lane 127 carries the constant 1.0
    # that pulls the biases out of the packed weight slabs.
    x_pad = jnp.zeros((Bp, LANE), jnp.float32)
    x_pad = x_pad.at[:B, :INPUT_SIZE].set(x.astype(jnp.float32))
    x_pad = x_pad.at[:, LANE - 1].set(1.0)

    out_pad = pl.pallas_call(
        mlp_kernel,
        out_shape=jax.ShapeDtypeStruct((Bp, LANE), jnp.float32),
        grid=(n_tiles,),
        in_specs=[
            pl.BlockSpec((TILE_B, LANE), lambda i: (i, 0)),  # stream batch tiles
            pl.BlockSpec((LANE, LANE), lambda i: (0, 0)),    # weights VMEM-resident
            pl.BlockSpec((LANE, LANE), lambda i: (0, 0)),
        ],
        out_specs=pl.BlockSpec((TILE_B, LANE), lambda i: (i, 0)),
        compiler_params=pltpu.CompilerParams(
            dimension_semantics=("parallel",)),              # shards over v7x's 2 TCs
    )(x_pad, w1_pack, w2_pack)

    # Slice the lane / batch padding off outside the kernel.
    return out_pad[:B, :OUTPUT_SIZE]


def init_params(key):
    k1, k2, k3, k4 = jax.random.split(key, 4)
    # Deterministic init mimicking nn.Linear's uniform(-1/sqrt(fan_in), 1/sqrt(fan_in)).
    bound1 = 1.0 / (INPUT_SIZE ** 0.5)
    bound2 = 1.0 / (HIDDEN_SIZE ** 0.5)
    w1 = jax.random.uniform(k1, (INPUT_SIZE, HIDDEN_SIZE), jnp.float32, -bound1, bound1)
    b1 = jax.random.uniform(k2, (HIDDEN_SIZE,), jnp.float32, -bound1, bound1)
    w2 = jax.random.uniform(k3, (HIDDEN_SIZE, OUTPUT_SIZE), jnp.float32, -bound2, bound2)
    b2 = jax.random.uniform(k4, (OUTPUT_SIZE,), jnp.float32, -bound2, bound2)
    return w1, b1, w2, b2


if __name__ == "__main__":
    key = jax.random.PRNGKey(0)
    kx, kp = jax.random.split(key)
    x = jax.random.normal(kx, (BATCH, INPUT_SIZE), dtype=jnp.float32)
    w1, b1, w2, b2 = init_params(kp)

    # Pack weights+biases once (amortized outside the per-call path).
    w1_pack, w2_pack = pack_params(w1, b1, w2, b2)

    out = skin_condition_forward(x, w1_pack, w2_pack)
    out = jax.block_until_ready(out)

    # Reference check in plain JAX (same math as the PyTorch forward).
    ref = jnp.maximum(x @ w1 + b1[None, :], 0.0) @ w2 + b2[None, :]
    assert out.shape == (BATCH, OUTPUT_SIZE)
    assert jnp.allclose(out, ref, atol=1e-4, rtol=1e-4)

    print("KERNEL_OK")
</pallas_src>

<mosaic_0001>
module attributes {stable_mosaic.version = 11 : i64} {
  func.func @mlp_kernel(%arg0: i32, %arg1: memref<128x128xf32, #tpu.memory_space<vmem>>, %arg2: memref<128x128xf32, #tpu.memory_space<vmem>>, %arg3: memref<128x128xf32, #tpu.memory_space<vmem>>, %arg4: memref<128x128xf32, #tpu.memory_space<vmem>>) attributes {dimension_semantics = [#tpu.dimension_semantics<parallel>], iteration_bounds = array<i64: 2>, scalar_prefetch = 0 : i64, scratch_operands = 0 : i64, tpu.core_type = #tpu.core_type<tc>, window_params = [{transform_indices = @transform_0, window_bounds = array<i64: 128, 128>}, {pipeline_mode = #tpu.pipeline_mode<synchronous>, transform_indices = @transform_1, window_bounds = array<i64: 128, 128>}, {pipeline_mode = #tpu.pipeline_mode<synchronous>, transform_indices = @transform_2, window_bounds = array<i64: 128, 128>}, {transform_indices = @transform_3, window_bounds = array<i64: 128, 128>}]} {
    %c0 = arith.constant 0 : index
    %c0_0 = arith.constant 0 : index
    %0 = vector.load %arg1[%c0, %c0_0] : memref<128x128xf32, #tpu.memory_space<vmem>>, vector<128x128xf32>
    %c0_1 = arith.constant 0 : index
    %c0_2 = arith.constant 0 : index
    %1 = vector.load %arg2[%c0_1, %c0_2] : memref<128x128xf32, #tpu.memory_space<vmem>>, vector<128x128xf32>
    %cst = arith.constant dense<0.000000e+00> : vector<128x128xf32>
    %2 = tpu.matmul %0, %1, %cst {dimension_numbers = #tpu.dot_dimension_numbers<[1], [0], [0], [1], [0, 0, 1, 1], [], []>} : vector<128x128xf32>, vector<128x128xf32>, vector<128x128xf32> -> vector<128x128xf32>
    %cst_3 = arith.constant 0.000000e+00 : f32
    %3 = vector.broadcast %cst_3 : f32 to vector<128x128xf32>
    %4 = arith.maximumf %2, %3 : vector<128x128xf32>
    %c0_4 = arith.constant 0 : index
    %c0_5 = arith.constant 0 : index
    %5 = vector.load %arg3[%c0_4, %c0_5] : memref<128x128xf32, #tpu.memory_space<vmem>>, vector<128x128xf32>
    %cst_6 = arith.constant dense<0.000000e+00> : vector<128x128xf32>
    %6 = tpu.matmul %4, %5, %cst_6 {dimension_numbers = #tpu.dot_dimension_numbers<[1], [0], [0], [1], [0, 0, 1, 1], [], []>} : vector<128x128xf32>, vector<128x128xf32>, vector<128x128xf32> -> vector<128x128xf32>
    %c0_7 = arith.constant 0 : index
    %c0_8 = arith.constant 0 : index
    %7 = vector.load %arg4[%c0_7, %c0_8] : memref<128x128xf32, #tpu.memory_space<vmem>>, vector<128x128xf32>
    tpu.vector_store %arg4[%c0_7, %c0_8], %6 {strides = array<i32>} : memref<128x128xf32, #tpu.memory_space<vmem>>, vector<128x128xf32>,
    return
  }
  func.func @transform_0(%arg0: i32) -> (i32, i32) {
    %c0_i32 = arith.constant 0 : i32
    %c0_i32_0 = arith.constant 0 : i32
    return %arg0, %c0_i32 : i32, i32
  }
  func.func @transform_1(%arg0: i32) -> (i32, i32) {
    %c0_i32 = arith.constant 0 : i32
    %c0_i32_0 = arith.constant 0 : i32
    %c0_i32_1 = arith.constant 0 : i32
    return %c0_i32, %c0_i32_0 : i32, i32
  }
  func.func @transform_2(%arg0: i32) -> (i32, i32) {
    %c0_i32 = arith.constant 0 : i32
    %c0_i32_0 = arith.constant 0 : i32
    %c0_i32_1 = arith.constant 0 : i32
    return %c0_i32, %c0_i32_0 : i32, i32
  }
  func.func @transform_3(%arg0: i32) -> (i32, i32) {
    %c0_i32 = arith.constant 0 : i32
    %c0_i32_0 = arith.constant 0 : i32
    return %arg0, %c0_i32 : i32, i32
  }
}

</mosaic_0001>

<llo_original>
// kernel: skin_condition_forward.1
$region0: #{skin_condition_forward.1}
  #allocation0 [shape = 'u32[]', space=smem, size = 0x4, offset = 0x4, fixed_abs, tag = 'smem constant byte address 0x4 - core index']
  #allocation1 [shape = 'u32[144,128]{1,0:T(1,128)}', space=vmem, size = 0x12000, scoped, tag = 'internal scratch']
  %s0 = inlined_call_operand.vmem [shape: f32[256,128], index: 0, kind: input, shape index: {}]
  %s1 = inlined_call_operand.vmem [shape: f32[128,128], index: 1, kind: input, shape index: {}]
  %s2 = inlined_call_operand.vmem [shape: f32[128,128], index: 2, kind: input, shape index: {}]
  %s3 = inlined_call_operand.vmem [shape: f32[256,128], index: 3, kind: output, shape index: {}]
  %s4 = sld [smem:[#allocation0]]
  $region45: #{skin_condition_forward.1} parent=0
    _
  %s6 = ssub.s32 1, %s4
  %s7 = scalar_select 0, %s6, %s4
  loop: start=0, step=1, limit=4
  $region2: #{skin_condition_forward.1} parent=0 // loop_pre_header
    _
  $region3: #{skin_condition_forward.1} parent=0 // loop_header
    %s9 = sphi 0, %s13
    %p10 = scmp.ge.s32.totalorder %s9, 4
    %s19 = sphi 0, %s21
    %s22 = sphi 0, %s19
    %s23 = sphi 0, %s22
    %s39 = sphi 0, %s23
    %s43 = sphi 0, %s43
    %s45 = sphi 0, %s43
    %s46 = sphi 0, %s45
    %s60 = sphi 0, %s46
    %s64 = sphi 0, %s64
    %s66 = sphi 0, %s64
    %s67 = sphi 0, %s66
    %s81 = sphi 0, %s67
    %s87 = sphi 0, %s89
    %s90 = sphi 0, %s87
    %s91 = sphi 0, %s90
    %s107 = sphi 0, %s91
  $region4: #{skin_condition_forward.1} parent=0 // loop_header_branch
    %12 = sbr.rel (%p10) target = $region8
  $region5: #{skin_condition_forward.1} parent=0 // loop_body
    %s14 = ssub.s32 %s9, 1
    %s15 = ssub.s32 %s9, 2
    %s16 = sadd.s32 %s9, 1
    %s17 = ssub.s32 %s9, %s16
    %p18 = scmp.eq.s32.totalorder %s17, 0
    %s20 = sadd.s32 %s19, 1
    %s21 = scalar_select %p18, %s19, %s20
    %p24 = pneg %p18
    %p25 = scmp.eq.s32.totalorder %s9, 1
    %p26 = por %p24, %p25
    %p27 = scmp.ne.s32.totalorder %s19, %s22
    %p28 = scmp.eq.s32.totalorder %s9, 0
    %p29 = por %p27, %p28
    %p30 = scmp.ne.s32.totalorder %s19, %s22
    %p31 = scmp.eq.s32.totalorder %s14, 1
    %p32 = por %p30, %p31
    %p33 = scmp.ne.s32.totalorder %s22, %s23
    %p34 = scmp.eq.s32.totalorder %s14, 0
    %p35 = por %p33, %p34
    %p36 = scmp.ne.s32.totalorder %s22, %s23
    %p37 = scmp.eq.s32.totalorder %s15, 1
    %p38 = por %p36, %p37
    %p40 = scmp.ne.s32.totalorder %s23, %s39
    %p41 = scmp.eq.s32.totalorder %s15, 0
    %p42 = por %p40, %p41
    %s44 = sadd.s32 %s43, 1
    %p47 = scmp.eq.s32.totalorder %s9, 1
    %p48 = scmp.ne.s32.totalorder %s43, %s45
    %p49 = scmp.eq.s32.totalorder %s9, 0
    %p50 = por %p48, %p49
    %p51 = scmp.ne.s32.totalorder %s43, %s45
    %p52 = scmp.eq.s32.totalorder %s14, 1
    %p53 = por %p51, %p52
    %p54 = scmp.ne.s32.totalorder %s45, %s46
    %p55 = scmp.eq.s32.totalorder %s14, 0
    %p56 = por %p54, %p55
    %p57 = scmp.ne.s32.totalorder %s45, %s46
    %p58 = scmp.eq.s32.totalorder %s15, 1
    %p59 = por %p57, %p58
    %p61 = scmp.ne.s32.totalorder %s46, %s60
    %p62 = scmp.eq.s32.totalorder %s15, 0
    %p63 = por %p61, %p62
    %s65 = sadd.s32 %s64, 1
    %p68 = scmp.eq.s32.totalorder %s9, 1
    %p69 = scmp.ne.s32.totalorder %s64, %s66
    %p70 = scmp.eq.s32.totalorder %s9, 0
    %p71 = por %p69, %p70
    %p72 = scmp.ne.s32.totalorder %s64, %s66
    %p73 = scmp.eq.s32.totalorder %s14, 1
    %p74 = por %p72, %p73
    %p75 = scmp.ne.s32.totalorder %s66, %s67
    %p76 = scmp.eq.s32.totalorder %s14, 0
    %p77 = por %p75, %p76
    %p78 = scmp.ne.s32.totalorder %s66, %s67
    %p79 = scmp.eq.s32.totalorder %s15, 1
    %p80 = por %p78, %p79
    %p82 = scmp.ne.s32.totalorder %s67, %s81
    %p83 = scmp.eq.s32.totalorder %s15, 0
    %p84 = por %p82, %p83
    %s85 = ssub.s32 %s9, %s16
    %p86 = scmp.eq.s32.totalorder %s85, 0
    %s88 = sadd.s32 %s87, 1
    %s89 = scalar_select %p86, %s87, %s88
    %p92 = pneg %p86
    %p93 = scmp.eq.s32.totalorder %s9, 1
    %p94 = por %p92, %p93
    %p95 = scmp.ne.s32.totalorder %s87, %s90
    %p96 = scmp.eq.s32.totalorder %s9, 0
    %p97 = por %p95, %p96
    %p98 = scmp.ne.s32.totalorder %s87, %s90
    %p99 = scmp.eq.s32.totalorder %s14, 1
    %p100 = por %p98, %p99
    %p101 = scmp.ne.s32.totalorder %s90, %s91
    %p102 = scmp.eq.s32.totalorder %s14, 0
    %p103 = por %p101, %p102
    %p104 = scmp.ne.s32.totalorder %s90, %s91
    %p105 = scmp.eq.s32.totalorder %s15, 1
    %p106 = por %p104, %p105
    %p108 = scmp.ne.s32.totalorder %s91, %s107
    %p109 = scmp.eq.s32.totalorder %s15, 0
    %p110 = por %p108, %p109
    %p111 = scmp.le.s32.totalorder 1, %s9
    %p112 = scmp.lt.s32.totalorder %s9, 3
    %p113 = pnand %p111, %p112
    %p114 = pneg %p113
    // Predicated region
    $region9: #{skin_condition_forward.1} parent=5 // pred_check
      _
    $region10: #{skin_condition_forward.1} parent=5 // pred_check_branch
      %116 = sbr.rel (%p113) target = $region12
    $region11: #{skin_condition_forward.1} parent=5 // pred_region
      %s117 = ssub.s32 %s9, 1
      // Predicated region
      $region13: #{skin_condition_forward.1} parent=11 // pred_check
        %p118 = pneg %p56
      $region14: #{skin_condition_forward.1} parent=11 // pred_check_branch
        %120 = sbr.rel (%p118) target = $region16
      $region15: #{skin_condition_forward.1} parent=11 // pred_region
        _
      $region16: #{skin_condition_forward.1} parent=11 // pred_fallthru
        _
      // Predicated region
      $region17: #{skin_condition_forward.1} parent=11 // pred_check
        %p121 = pneg %p77
      $region18: #{skin_condition_forward.1} parent=11 // pred_check_branch
        %123 = sbr.rel (%p121) target = $region20
      $region19: #{skin_condition_forward.1} parent=11 // pred_region
        _
      $region20: #{skin_condition_forward.1} parent=11 // pred_fallthru
        _
    $region12: #{skin_condition_forward.1} parent=5 // pred_fallthru
      _
    %p124 = scmp.lt.s32.totalorder %s9, 2
    // Predicated region
    $region21: #{skin_condition_forward.1} parent=5 // pred_check
      %p125 = pneg %p124
    $region22: #{skin_condition_forward.1} parent=5 // pred_check_branch
      %127 = sbr.rel (%p125) target = $region24
    $region23: #{skin_condition_forward.1} parent=5 // pred_region
      // Predicated region
      $region25: #{skin_condition_forward.1} parent=23 // pred_check
        %p128 = pneg %p29
      $region26: #{skin_condition_forward.1} parent=23 // pred_check_branch
        %130 = sbr.rel (%p128) target = $region28
      $region27: #{skin_condition_forward.1} parent=23 // pred_region
        %s131 = smul.u32 16, %s9
        %p132 = scmp.lt.s32.totalorder %s131, 31
        %s133 = scalar_select %p132, %s131, 31
        %s134 = smul.addr %s133, 8
        %s135 = scalar_lea.vmem %s0, %s134
        %s136 = smul.u32 16, %s9
      $region28: #{skin_condition_forward.1} parent=23 // pred_fallthru
        _
    $region24: #{skin_condition_forward.1} parent=5 // pred_fallthru
      _
    %p137 = scmp.le.s32.totalorder 1, %s9
    %p138 = scmp.lt.s32.totalorder %s9, 3
    %p139 = pnand %p137, %p138
    %p140 = pneg %p139
    // Predicated region
    $region29: #{skin_condition_forward.1} parent=5 // pred_check
      _
    $region30: #{skin_condition_forward.1} parent=5 // pred_check_branch
      %142 = sbr.rel (%p139) target = $region32
    $region31: #{skin_condition_forward.1} parent=5 // pred_region
      %s143 = ssub.s32 %s9, 1
      %s144 = smul.u32 16, %s14
      %p145 = scmp.lt.s32.totalorder %s144, 31
      %s146 = scalar_select %p145, %s144, 31
      %s147 = smul.addr %s146, 8
      %s148 = scalar_lea.vmem %s0, %s147
      %p149 = pneg %p35
      %p150 = pneg %p32
      %p151 = pneg %p56
      %p152 = pneg %p53
      %p153 = pneg %p77
      %p154 = pneg %p74
      %p155 = pneg %p103
      %p156 = pneg %p100
      %s157 = smul.u32 16, %s14
      %p158 = scmp.lt.s32.totalorder %s157, 31
      %s159 = scalar_select %p158, %s157, 31
      %s160 = smul.addr %s159, 8
      %s161 = scalar_lea.vmem %s3, %s160
      %s162 = smul.u32 16, %s14
      %p163 = scmp.lt.s32.totalorder %s162, 31
      %s164 = scalar_select %p163, %s162, 31
      %s165 = smul.addr %s164, 8
      %s166 = scalar_lea.vmem %s0, %s165
      %s167 = smul.u32 16, %s14
      %s168 = smul.u32 16, %s14
      %p169 = scmp.lt.s32.totalorder %s168, 31
      %s170 = scalar_select %p169, %s168, 31
      %s171 = smul.addr %s170, 8
      %s172 = scalar_lea.vmem %s3, %s171
      %s173 = smul.u32 16, %s14
      %v174 = vld [vmem:[%s166] sm:$0xff]
      %v175 = vld [vmem:[%s166 + $0x8] sm:$0xff]
      %v176 = vld [vmem:[%s166 + $0x10] sm:$0xff]
      %v177 = vld [vmem:[%s166 + $0x18] sm:$0xff]
      %v178 = vld [vmem:[%s166 + $0x20] sm:$0xff]
      %v179 = vld [vmem:[%s166 + $0x28] sm:$0xff]
      %v180 = vld [vmem:[%s166 + $0x30] sm:$0xff]
      %v181 = vld [vmem:[%s166 + $0x38] sm:$0xff]
      %v182 = vld [vmem:[%s166 + $0x40] sm:$0xff]
      %v183 = vld [vmem:[%s166 + $0x48] sm:$0xff]
      %v184 = vld [vmem:[%s166 + $0x50] sm:$0xff]
      %v185 = vld [vmem:[%s166 + $0x58] sm:$0xff]
      %v186 = vld [vmem:[%s166 + $0x60] sm:$0xff]
      %v187 = vld [vmem:[%s166 + $0x68] sm:$0xff]
      %v188 = vld [vmem:[%s166 + $0x70] sm:$0xff]
      %v189 = vld [vmem:[%s166 + $0x78] sm:$0xff]
      %v190 = vld [vmem:[%s1] sm:$0xff]
      %v191 = vld [vmem:[%s1 + $0x8] sm:$0xff]
      %v192 = vld [vmem:[%s1 + $0x10] sm:$0xff]
      %v193 = vld [vmem:[%s1 + $0x18] sm:$0xff]
      %v194 = vld [vmem:[%s1 + $0x20] sm:$0xff]
      %v195 = vld [vmem:[%s1 + $0x28] sm:$0xff]
      %v196 = vld [vmem:[%s1 + $0x30] sm:$0xff]
      %v197 = vld [vmem:[%s1 + $0x38] sm:$0xff]
      %v198 = vld [vmem:[%s1 + $0x40] sm:$0xff]
      %v199 = vld [vmem:[%s1 + $0x48] sm:$0xff]
      %v200 = vld [vmem:[%s1 + $0x50] sm:$0xff]
      %v201 = vld [vmem:[%s1 + $0x58] sm:$0xff]
      %v202 = vld [vmem:[%s1 + $0x60] sm:$0xff]
      %v203 = vld [vmem:[%s1 + $0x68] sm:$0xff]
      %v204 = vld [vmem:[%s1 + $0x70] sm:$0xff]
      %v205 = vld [vmem:[%s1 + $0x78] sm:$0xff]
      %206 = vmatprep.subr.mxu0 0.0
      %207 = vmatpush1.msra.mxu0 %v190
      %208 = vmatprep.subr.mxu0 0.0
      %209 = vmatpush1.msra.mxu0 %v191
      %210 = vmatprep.subr.mxu0 0.0
      %211 = vmatpush1.msra.mxu0 %v192
      %212 = vmatprep.subr.mxu0 0.0
      %213 = vmatpush1.msra.mxu0 %v193
      %214 = vmatprep.subr.mxu0 0.0
      %215 = vmatpush1.msra.mxu0 %v194
      %216 = vmatprep.subr.mxu0 0.0
      %217 = vmatpush1.msra.mxu0 %v195
      %218 = vmatprep.subr.mxu0 0.0
      %219 = vmatpush1.msra.mxu0 %v196
      %220 = vmatprep.subr.mxu0 0.0
      %221 = vmatpush1.msra.mxu0 %v197
      %222 = vmatprep.subr.mxu0 0.0
      %223 = vmatpush1.msra.mxu0 %v198
      %224 = vmatprep.subr.mxu0 0.0
      %225 = vmatpush1.msra.mxu0 %v199
      %226 = vmatprep.subr.mxu0 0.0
      %227 = vmatpush1.msra.mxu0 %v200
      %228 = vmatprep.subr.mxu0 0.0
      %229 = vmatpush1.msra.mxu0 %v201
      %230 = vmatprep.subr.mxu0 0.0
      %231 = vmatpush1.msra.mxu0 %v202
      %232 = vmatprep.subr.mxu0 0.0
      %233 = vmatpush1.msra.mxu0 %v203
      %234 = vmatprep.subr.mxu0 0.0
      %235 = vmatpush1.msra.mxu0 %v204
      %236 = vmatprep.subr.mxu0 0.0
      %237 = vmatpush1.msra.mxu0 %v205
      %238 = vmatprep.subr.mxu0 0.0
      %239 = vmatpush1.msra.mxu0 0.0
      %240 = vmatprep.subr.mxu0 0.0
      %241 = vmatpush1.msra.mxu0 0.0
      %242 = vmatprep.subr.mxu0 0.0
      %243 = vmatpush1.msra.mxu0 0.0
      %244 = vmatprep.subr.mxu0 0.0
      %245 = vmatpush1.msra.mxu0 0.0
      %246 = vmatprep.subr.mxu0 0.0
      %247 = vmatpush1.msra.mxu0 0.0
      %248 = vmatprep.subr.mxu0 0.0
      %249 = vmatpush1.msra.mxu0 0.0
      %250 = vmatprep.subr.mxu0 0.0
      %251 = vmatpush1.msra.mxu0 0.0
      %252 = vmatprep.subr.mxu0 0.0
      %253 = vmatpush1.msra.mxu0 0.0
      %254 = vmatprep.subr.mxu0 0.0
      %255 = vmatpush1.msra.mxu0 0.0
      %256 = vmatprep.subr.mxu0 0.0
      %257 = vmatpush1.msra.mxu0 0.0
      %258 = vmatprep.subr.mxu0 0.0
      %259 = vmatpush1.msra.mxu0 0.0
      %260 = vmatprep.subr.mxu0 0.0
      %261 = vmatpush1.msra.mxu0 0.0
      %262 = vmatprep.subr.mxu0 0.0
      %263 = vmatpush1.msra.mxu0 0.0
      %264 = vmatprep.subr.mxu0 0.0
      %265 = vmatpush1.msra.mxu0 0.0
      %266 = vmatprep.subr.mxu0 0.0
      %267 = vmatpush1.msra.mxu0 0.0
      %268 = vmatprep.subr.mxu0 0.0
      %269 = vmatpush1.msra.mxu0 0.0
      %270 = vmatprep.mubr.f32.mxu0 0.0
      %271 = vmatmul.mubr.f32.gmra.mrb[0].mxu0 %v174
      %v272 = vpop.f32.mrb[0].mxu0
      %v273 = vadd.f32 0.0, %v272
      %v274 = vpop.f32.mrb[0].mxu0
      %275 = vmatprep.mubr.f32.mxu0 0.0
      %276 = vmatmul.mubr.f32.gmra.mrb[0].mxu0 %v175
      %v277 = vpop.f32.mrb[0].mxu0
      %v278 = vadd.f32 0.0, %v277
      %v279 = vpop.f32.mrb[0].mxu0
      %280 = vmatprep.mubr.f32.mxu0 0.0
      %281 = vmatmul.mubr.f32.gmra.mrb[0].mxu0 %v176
      %v282 = vpop.f32.mrb[0].mxu0
      %v283 = vadd.f32 0.0, %v282
      %v284 = vpop.f32.mrb[0].mxu0
      %285 = vmatprep.mubr.f32.mxu0 0.0
      %286 = vmatmul.mubr.f32.gmra.mrb[0].mxu0 %v177
      %v287 = vpop.f32.mrb[0].mxu0
      %v288 = vadd.f32 0.0, %v287
      %v289 = vpop.f32.mrb[0].mxu0
      %290 = vmatprep.mubr.f32.mxu0 0.0
      %291 = vmatmul.mubr.f32.gmra.mrb[0].mxu0 %v178
      %v292 = vpop.f32.mrb[0].mxu0
      %v293 = vadd.f32 0.0, %v292
      %v294 = vpop.f32.mrb[0].mxu0
      %295 = vmatprep.mubr.f32.mxu0 0.0
      %296 = vmatmul.mubr.f32.gmra.mrb[0].mxu0 %v179
      %v297 = vpop.f32.mrb[0].mxu0
      %v298 = vadd.f32 0.0, %v297
      %v299 = vpop.f32.mrb[0].mxu0
      %300 = vmatprep.mubr.f32.mxu0 0.0
      %301 = vmatmul.mubr.f32.gmra.mrb[0].mxu0 %v180
      %v302 = vpop.f32.mrb[0].mxu0
      %v303 = vadd.f32 0.0, %v302
      %v304 = vpop.f32.mrb[0].mxu0
      %305 = vmatprep.mubr.f32.mxu0 0.0
      %306 = vmatmul.mubr.f32.gmra.mrb[0].mxu0 %v181
      %v307 = vpop.f32.mrb[0].mxu0
      %v308 = vadd.f32 0.0, %v307
      %v309 = vpop.f32.mrb[0].mxu0
      %310 = vmatprep.mubr.f32.mxu0 0.0
      %311 = vmatmul.mubr.f32.gmra.mrb[0].mxu0 %v182
      %v312 = vpop.f32.mrb[0].mxu0
      %v313 = vadd.f32 0.0, %v312
      %v314 = vpop.f32.mrb[0].mxu0
      %315 = vmatprep.mubr.f32.mxu0 0.0
      %316 = vmatmul.mubr.f32.gmra.mrb[0].mxu0 %v183
      %v317 = vpop.f32.mrb[0].mxu0
      %v318 = vadd.f32 0.0, %v317
      %v319 = vpop.f32.mrb[0].mxu0
      %320 = vmatprep.mubr.f32.mxu0 0.0
      %321 = vmatmul.mubr.f32.gmra.mrb[0].mxu0 %v184
      %v322 = vpop.f32.mrb[0].mxu0
      %v323 = vadd.f32 0.0, %v322
      %v324 = vpop.f32.mrb[0].mxu0
      %325 = vmatprep.mubr.f32.mxu0 0.0
      %326 = vmatmul.mubr.f32.gmra.mrb[0].mxu0 %v185
      %v327 = vpop.f32.mrb[0].mxu0
      %v328 = vadd.f32 0.0, %v327
      %v329 = vpop.f32.mrb[0].mxu0
      %330 = vmatprep.mubr.f32.mxu0 0.0
      %331 = vmatmul.mubr.f32.gmra.mrb[0].mxu0 %v186
      %v332 = vpop.f32.mrb[0].mxu0
      %v333 = vadd.f32 0.0, %v332
      %v334 = vpop.f32.mrb[0].mxu0
      %335 = vmatprep.mubr.f32.mxu0 0.0
      %336 = vmatmul.mubr.f32.gmra.mrb[0].mxu0 %v187
      %v337 = vpop.f32.mrb[0].mxu0
      %v338 = vadd.f32 0.0, %v337
      %v339 = vpop.f32.mrb[0].mxu0
      %340 = vmatprep.mubr.f32.mxu0 0.0
      %341 = vmatmul.mubr.f32.gmra.mrb[0].mxu0 %v188
      %v342 = vpop.f32.mrb[0].mxu0
      %v343 = vadd.f32 0.0, %v342
      %v344 = vpop.f32.mrb[0].mxu0
      %345 = vmatprep.mubr.f32.mxu0 0.0
      %346 = vmatmul.mubr.f32.gmra.mrb[0].mxu0 %v189
      %v347 = vpop.f32.mrb[0].mxu0
      %v348 = vadd.f32 0.0, %v347
      %v349 = vpop.f32.mrb[0].mxu0
      %350 = vdwg.mxu0
      %v351 = vmax.f32 %v273, 0.0
      %v352 = vmax.f32 %v278, 0.0
      %v353 = vmax.f32 %v283, 0.0
      %v354 = vmax.f32 %v288, 0.0
      %v355 = vmax.f32 %v293, 0.0
      %v356 = vmax.f32 %v298, 0.0
      %v357 = vmax.f32 %v303, 0.0
      %v358 = vmax.f32 %v308, 0.0
      %v359 = vmax.f32 %v313, 0.0
      %v360 = vmax.f32 %v318, 0.0
      %v361 = vmax.f32 %v323, 0.0
      %v362 = vmax.f32 %v328, 0.0
      %v363 = vmax.f32 %v333, 0.0
      %v364 = vmax.f32 %v338, 0.0
      %v365 = vmax.f32 %v343, 0.0
      %v366 = vmax.f32 %v348, 0.0
      %v367 = vld [vmem:[%s2] sm:$0xff]
      %v368 = vld [vmem:[%s2 + $0x8] sm:$0xff]
      %v369 = vld [vmem:[%s2 + $0x10] sm:$0xff]
      %v370 = vld [vmem:[%s2 + $0x18] sm:$0xff]
      %v371 = vld [vmem:[%s2 + $0x20] sm:$0xff]
      %v372 = vld [vmem:[%s2 + $0x28] sm:$0xff]
      %v373 = vld [vmem:[%s2 + $0x30] sm:$0xff]
      %v374 = vld [vmem:[%s2 + $0x38] sm:$0xff]
      %v375 = vld [vmem:[%s2 + $0x40] sm:$0xff]
      %v376 = vld [vmem:[%s2 + $0x48] sm:$0xff]
      %v377 = vld [vmem:[%s2 + $0x50] sm:$0xff]
      %v378 = vld [vmem:[%s2 + $0x58] sm:$0xff]
      %v379 = vld [vmem:[%s2 + $0x60] sm:$0xff]
      %v380 = vld [vmem:[%s2 + $0x68] sm:$0xff]
      %v381 = vld [vmem:[%s2 + $0x70] sm:$0xff]
      %v382 = vld [vmem:[%s2 + $0x78] sm:$0xff]
      %383 = vmatprep.subr.mxu0 0.0
      %384 = vmatpush1.msra.mxu0 %v367
      %385 = vmatprep.subr.mxu0 0.0
      %386 = vmatpush1.msra.mxu0 %v368
      %387 = vmatprep.subr.mxu0 0.0
      %388 = vmatpush1.msra.mxu0 %v369
      %389 = vmatprep.subr.mxu0 0.0
      %390 = vmatpush1.msra.mxu0 %v370
      %391 = vmatprep.subr.mxu0 0.0
      %392 = vmatpush1.msra.mxu0 %v371
      %393 = vmatprep.subr.mxu0 0.0
      %394 = vmatpush1.msra.mxu0 %v372
      %395 = vmatprep.subr.mxu0 0.0
      %396 = vmatpush1.msra.mxu0 %v373
      %397 = vmatprep.subr.mxu0 0.0
      %398 = vmatpush1.msra.mxu0 %v374
      %399 = vmatprep.subr.mxu0 0.0
      %400 = vmatpush1.msra.mxu0 %v375
      %401 = vmatprep.subr.mxu0 0.0
      %402 = vmatpush1.msra.mxu0 %v376
      %403 = vmatprep.subr.mxu0 0.0
      %404 = vmatpush1.msra.mxu0 %v377
      %405 = vmatprep.subr.mxu0 0.0
      %406 = vmatpush1.msra.mxu0 %v378
      %407 = vmatprep.subr.mxu0 0.0
      %408 = vmatpush1.msra.mxu0 %v379
      %409 = vmatprep.subr.mxu0 0.0
      %410 = vmatpush1.msra.mxu0 %v380
      %411 = vmatprep.subr.mxu0 0.0
      %412 = vmatpush1.msra.mxu0 %v381
      %413 = vmatprep.subr.mxu0 0.0
      %414 = vmatpush1.msra.mxu0 %v382
      %415 = vmatprep.subr.mxu0 0.0
      %416 = vmatpush1.msra.mxu0 0.0
      %417 = vmatprep.subr.mxu0 0.0
      %418 = vmatpush1.msra.mxu0 0.0
      %419 = vmatprep.subr.mxu0 0.0
      %420 = vmatpush1.msra.mxu0 0.0
      %421 = vmatprep.subr.mxu0 0.0
      %422 = vmatpush1.msra.mxu0 0.0
      %423 = vmatprep.subr.mxu0 0.0
      %424 = vmatpush1.msra.mxu0 0.0
      %425 = vmatprep.subr.mxu0 0.0
      %426 = vmatpush1.msra.mxu0 0.0
      %427 = vmatprep.subr.mxu0 0.0
      %428 = vmatpush1.msra.mxu0 0.0
      %429 = vmatprep.subr.mxu0 0.0
      %430 = vmatpush1.msra.mxu0 0.0
      %431 = vmatprep.subr.mxu0 0.0
      %432 = vmatpush1.msra.mxu0 0.0
      %433 = vmatprep.subr.mxu0 0.0
      %434 = vmatpush1.msra.mxu0 0.0
      %435 = vmatprep.subr.mxu0 0.0
      %436 = vmatpush1.msra.mxu0 0.0
      %437 = vmatprep.subr.mxu0 0.0
      %438 = vmatpush1.msra.mxu0 0.0
      %439 = vmatprep.subr.mxu0 0.0
      %440 = vmatpush1.msra.mxu0 0.0
      %441 = vmatprep.subr.mxu0 0.0
      %442 = vmatpush1.msra.mxu0 0.0
      %443 = vmatprep.subr.mxu0 0.0
      %444 = vmatpush1.msra.mxu0 0.0
      %445 = vmatprep.subr.mxu0 0.0
      %446 = vmatpush1.msra.mxu0 0.0
      %447 = vmatprep.mubr.f32.mxu0 0.0
      %448 = vmatmul.mubr.f32.gmra.mrb[0].mxu0 %v351
      %v449 = vpop.f32.mrb[0].mxu0
      %v450 = vadd.f32 0.0, %v449
      %v451 = vpop.f32.mrb[0].mxu0
      %452 = vmatprep.mubr.f32.mxu0 0.0
      %453 = vmatmul.mubr.f32.gmra.mrb[0].mxu0 %v352
      %v454 = vpop.f32.mrb[0].mxu0
      %v455 = vadd.f32 0.0, %v454
      %v456 = vpop.f32.mrb[0].mxu0
      %457 = vmatprep.mubr.f32.mxu0 0.0
      %458 = vmatmul.mubr.f32.gmra.mrb[0].mxu0 %v353
      %v459 = vpop.f32.mrb[0].mxu0
      %v460 = vadd.f32 0.0, %v459
      %v461 = vpop.f32.mrb[0].mxu0
      %462 = vmatprep.mubr.f32.mxu0 0.0
      %463 = vmatmul.mubr.f32.gmra.mrb[0].mxu0 %v354
      %v464 = vpop.f32.mrb[0].mxu0
      %v465 = vadd.f32 0.0, %v464
      %v466 = vpop.f32.mrb[0].mxu0
      %467 = vmatprep.mubr.f32.mxu0 0.0
      %468 = vmatmul.mubr.f32.gmra.mrb[0].mxu0 %v355
      %v469 = vpop.f32.mrb[0].mxu0
      %v470 = vadd.f32 0.0, %v469
      %v471 = vpop.f32.mrb[0].mxu0
      %472 = vmatprep.mubr.f32.mxu0 0.0
      %473 = vmatmul.mubr.f32.gmra.mrb[0].mxu0 %v356
      %v474 = vpop.f32.mrb[0].mxu0
      %v475 = vadd.f32 0.0, %v474
      %v476 = vpop.f32.mrb[0].mxu0
      %477 = vmatprep.mubr.f32.mxu0 0.0
      %478 = vmatmul.mubr.f32.gmra.mrb[0].mxu0 %v357
      %v479 = vpop.f32.mrb[0].mxu0
      %v480 = vadd.f32 0.0, %v479
      %v481 = vpop.f32.mrb[0].mxu0
      %482 = vmatprep.mubr.f32.mxu0 0.0
      %483 = vmatmul.mubr.f32.gmra.mrb[0].mxu0 %v358
      %v484 = vpop.f32.mrb[0].mxu0
      %v485 = vadd.f32 0.0, %v484
      %v486 = vpop.f32.mrb[0].mxu0
      %487 = vmatprep.mubr.f32.mxu0 0.0
      %488 = vmatmul.mubr.f32.gmra.mrb[0].mxu0 %v359
      %v489 = vpop.f32.mrb[0].mxu0
      %v490 = vadd.f32 0.0, %v489
      %v491 = vpop.f32.mrb[0].mxu0
      %492 = vmatprep.mubr.f32.mxu0 0.0
      %493 = vmatmul.mubr.f32.gmra.mrb[0].mxu0 %v360
      %v494 = vpop.f32.mrb[0].mxu0
      %v495 = vadd.f32 0.0, %v494
      %v496 = vpop.f32.mrb[0].mxu0
      %497 = vmatprep.mubr.f32.mxu0 0.0
      %498 = vmatmul.mubr.f32.gmra.mrb[0].mxu0 %v361
      %v499 = vpop.f32.mrb[0].mxu0
      %v500 = vadd.f32 0.0, %v499
      %v501 = vpop.f32.mrb[0].mxu0
      %502 = vmatprep.mubr.f32.mxu0 0.0
      %503 = vmatmul.mubr.f32.gmra.mrb[0].mxu0 %v362
      %v504 = vpop.f32.mrb[0].mxu0
      %v505 = vadd.f32 0.0, %v504
      %v506 = vpop.f32.mrb[0].mxu0
      %507 = vmatprep.mubr.f32.mxu0 0.0
      %508 = vmatmul.mubr.f32.gmra.mrb[0].mxu0 %v363
      %v509 = vpop.f32.mrb[0].mxu0
      %v510 = vadd.f32 0.0, %v509
      %v511 = vpop.f32.mrb[0].mxu0
      %512 = vmatprep.mubr.f32.mxu0 0.0
      %513 = vmatmul.mubr.f32.gmra.mrb[0].mxu0 %v364
      %v514 = vpop.f32.mrb[0].mxu0
      %v515 = vadd.f32 0.0, %v514
      %v516 = vpop.f32.mrb[0].mxu0
      %517 = vmatprep.mubr.f32.mxu0 0.0
      %518 = vmatmul.mubr.f32.gmra.mrb[0].mxu0 %v365
      %v519 = vpop.f32.mrb[0].mxu0
      %v520 = vadd.f32 0.0, %v519
      %v521 = vpop.f32.mrb[0].mxu0
      %522 = vmatprep.mubr.f32.mxu0 0.0
      %523 = vmatmul.mubr.f32.gmra.mrb[0].mxu0 %v366
      %v524 = vpop.f32.mrb[0].mxu0
      %v525 = vadd.f32 0.0, %v524
      %v526 = vpop.f32.mrb[0].mxu0
      %527 = vdwg.mxu0
      %528 = vst [vmem:[%s172] sm:$0xff] %v450
      %529 = vst [vmem:[%s172 + $0x8] sm:$0xff] %v455
      %530 = vst [vmem:[%s172 + $0x10] sm:$0xff] %v460
      %531 = vst [vmem:[%s172 + $0x18] sm:$0xff] %v465
      %532 = vst [vmem:[%s172 + $0x20] sm:$0xff] %v470
      %533 = vst [vmem:[%s172 + $0x28] sm:$0xff] %v475
      %534 = vst [vmem:[%s172 + $0x30] sm:$0xff] %v480
      %535 = vst [vmem:[%s172 + $0x38] sm:$0xff] %v485
      %536 = vst [vmem:[%s172 + $0x40] sm:$0xff] %v490
      %537 = vst [vmem:[%s172 + $0x48] sm:$0xff] %v495
      %538 = vst [vmem:[%s172 + $0x50] sm:$0xff] %v500
      %539 = vst [vmem:[%s172 + $0x58] sm:$0xff] %v505
      %540 = vst [vmem:[%s172 + $0x60] sm:$0xff] %v510
      %541 = vst [vmem:[%s172 + $0x68] sm:$0xff] %v515
      %542 = vst [vmem:[%s172 + $0x70] sm:$0xff] %v520
      %543 = vst [vmem:[%s172 + $0x78] sm:$0xff] %v525
      %s544 = smul.u32 16, %s14
      %p545 = scmp.lt.s32.totalorder %s544, 31
      %s546 = scalar_select %p545, %s544, 31
      %s547 = smul.addr %s546, 8
      %s548 = scalar_lea.vmem %s3, %s547
      // Predicated region
      $region33: #{skin_condition_forward.1} parent=31 // pred_check
        %p549 = pneg %p100
      $region34: #{skin_condition_forward.1} parent=31 // pred_check_branch
        %551 = sbr.rel (%p549) target = $region36
      $region35: #{skin_condition_forward.1} parent=31 // pred_region
        %s552 = smul.u32 16, %s14
      $region36: #{skin_condition_forward.1} parent=31 // pred_fallthru
        _
    $region32: #{skin_condition_forward.1} parent=5 // pred_fallthru
      _
    %p553 = scmp.le.s32.totalorder 2, %s9
    // Predicated region
    $region37: #{skin_condition_forward.1} parent=5 // pred_check
      %p554 = pneg %p553
    $region38: #{skin_condition_forward.1} parent=5 // pred_check_branch
      %556 = sbr.rel (%p554) target = $region40
    $region39: #{skin_condition_forward.1} parent=5 // pred_region
      %s557 = ssub.s32 %s9, 2
      // Predicated region
      $region41: #{skin_condition_forward.1} parent=39 // pred_check
        %p558 = pneg %p106
      $region42: #{skin_condition_forward.1} parent=39 // pred_check_branch
        %560 = sbr.rel (%p558) target = $region44
      $region43: #{skin_condition_forward.1} parent=39 // pred_region
        %s561 = smul.u32 16, %s15
        %p562 = scmp.lt.s32.totalorder %s561, 31
        %s563 = scalar_select %p562, %s561, 31
        %s564 = smul.addr %s563, 8
        %s565 = scalar_lea.vmem %s3, %s564
      $region44: #{skin_condition_forward.1} parent=39 // pred_fallthru
        _
    $region40: #{skin_condition_forward.1} parent=5 // pred_fallthru
      _
  $region6: #{skin_condition_forward.1} parent=0 // loop_footer
    %s13 = sadd.s32 1, %s9
  $region7: #{skin_condition_forward.1} parent=0 // loop_footer_branch
    %8 = sbr.rel target = $region3
  $region8: #{skin_condition_forward.1} parent=0 // loop_exit
    _

</llo_original>
